<compile_context>
chip_gen: v6e
topology: v6e:2x2x1
jax: 0.10.0
libtpu: 0.0.40
codegen_flags: <defaults>
</compile_context>

<pallas_src>
import jax
import jax.numpy as jnp
from jax import lax
from jax.experimental import pallas as pl
from jax.experimental.pallas import tpu as pltpu

LN_EPS = 1e-5


def _layer_norm(z, gamma, beta):
    """LayerNorm over the last (hidden) axis with affine params (1, H)."""
    mean = jnp.mean(z, axis=-1, keepdims=True)
    zc = z - mean
    var = jnp.mean(zc * zc, axis=-1, keepdims=True)
    inv = lax.rsqrt(var + LN_EPS)
    return zc * inv * gamma + beta


def _sigmoid(z):
    # sigmoid(z) == 0.5*tanh(0.5*z) + 0.5 : single EUP tanh instead of
    # exp + f32 divide (EUP push + multi-op VPU Newton iteration).
    return 0.5 * jnp.tanh(0.5 * z) + 0.5


def gru_ln_kernel(x_ref, s_ref, wx_ref, whur_ref, wph_ref, ln_ref, o_ref):
    H = s_ref.shape[-1]
    s = s_ref[...].astype(jnp.float32)

    ln = ln_ref[...].astype(jnp.float32)
    g_u, b_u = ln[0:1, :], ln[1:2, :]
    g_r, b_r = ln[2:3, :], ln[3:4, :]          # b_r already includes reset_bias
    g_p, b_p = ln[4:5, :], ln[5:6, :]

    # One wide x matmul for all three gates (N = 3H) and one wide h matmul for
    # update+reset (N = 2H); the concat([x, h]) of the torch module is folded
    # into these split weights in the wrapper.
    xw = jnp.dot(x_ref[...], wx_ref[...], preferred_element_type=jnp.float32)
    sw = jnp.dot(s_ref[...], whur_ref[...], preferred_element_type=jnp.float32)

    upd = _sigmoid(_layer_norm(xw[:, 0:H] + sw[:, 0:H], g_u, b_u))
    rst = _sigmoid(_layer_norm(xw[:, H:2 * H] + sw[:, H:2 * H], g_r, b_r))

    # Proposal: x-part comes from the merged matmul, (reset*h)-part needs its
    # own matmul because it depends on the reset gate.
    prop = xw[:, 2 * H:3 * H] + jnp.dot(
        (rst * s).astype(wph_ref.dtype), wph_ref[...],
        preferred_element_type=jnp.float32)
    h_n = jnp.tanh(_layer_norm(prop, g_p, b_p))

    o_ref[...] = ((1.0 - upd) * h_n + upd * s).astype(o_ref.dtype)


def _round_up(n, m):
    return ((n + m - 1) // m) * m


def _vmem_limits():
    """(vmem_limit_bytes we request, byte budget our tiling plan may consume)."""
    cap = 64 * 1024 * 1024                      # conservative fallback (v7x physical)
    try:
        cap = int(pltpu.get_tpu_info().vmem_capacity_bytes)
    except Exception:
        pass
    limit = int(0.75 * cap)
    budget = int(0.75 * limit)
    return limit, budget


def _num_tensorcores_hint():
    try:
        if "v7" in jax.devices()[0].device_kind.lower():
            return 2
    except Exception:
        pass
    return 1


def _pick_batch_tile(B, I_pad, H, weight_bytes, budget, batch_tile):
    if batch_tile is not None:
        assert B % batch_tile == 0, "batch_tile must divide B"
        assert batch_tile == B or batch_tile % 8 == 0, \
            "batch_tile must be a multiple of 8 (f32 sublane) or equal to B"
        return batch_tile
    tiles = [t for t in range(8, B + 1, 8) if B % t == 0]
    if B not in tiles:
        tiles.append(B)                         # tiny batches: one full block
    max_tb = B
    # Guarantee >= 2 "parallel" grid steps on 2-TensorCore chips (v7x) once the
    # batch is large enough to be worth splitting.
    if _num_tensorcores_hint() >= 2 and B >= 256 and (B // 2) in tiles:
        max_tb = B // 2

    def tile_bytes(tb):
        io = 2 * tb * (I_pad + 2 * H) * 4       # double-buffered x / s / out tiles
        live = 8 * tb * H * 4                   # f32 intermediates (xw 3H, sw 2H, gates)
        return io + live

    fitting = [t for t in tiles
               if t <= max_tb and weight_bytes + tile_bytes(t) <= budget]
    if fitting:
        return max(fitting)
    return min(tiles)


def gru_cell_layer_norm(inputs, state, params, *, reset_bias=1.0,
                        batch_tile=None, matmul_in_bf16=False):
    """inputs: (B, I), state: (B, H). params holds fused (I+H, H) weights
    (= torch_weight.T) and (1, H) LayerNorm gamma/beta per gate."""
    B, I = inputs.shape
    B2, H = state.shape
    assert B == B2, (B, B2)

    # Zero-pad the input feature dim to a lane-dense multiple of 128 (free:
    # padded x columns and padded weight rows are both zero).
    I_pad = max(_round_up(I, 128), 128)
    if I_pad != I:
        inputs = jnp.pad(inputs, ((0, 0), (0, I_pad - I)))

    def split_pad(w):  # fused (I+H, H) -> zero-padded x-part + h-part
        wx, wh = w[:I], w[I:]
        if I_pad != I:
            wx = jnp.pad(wx, ((0, I_pad - I), (0, 0)))
        return wx, wh

    wux, wuh = split_pad(params["w_update"])
    wrx, wrh = split_pad(params["w_reset"])
    wpx, wph = split_pad(params["w_proposal"])

    # Merge matmuls along the output (N) dimension.
    w_x_all = jnp.concatenate([wux, wrx, wpx], axis=1)        # (I_pad, 3H)
    w_h_ur = jnp.concatenate([wuh, wrh], axis=1)              # (H, 2H)

    # Pack all LayerNorm affine rows into a single (8, H) resident block;
    # reset_bias folded into the reset-gate beta.
    ln_pack = jnp.concatenate([
        params["g_update"], params["b_update"],
        params["g_reset"], params["b_reset"] + jnp.float32(reset_bias),
        params["g_proposal"], params["b_proposal"],
        jnp.zeros((2, H), jnp.float32),
    ], axis=0).astype(jnp.float32)                             # (8, H)

    mm_state = state
    if matmul_in_bf16:
        # Optional full-rate MXU path; NOT within the strict f32 test tolerance.
        inputs = inputs.astype(jnp.bfloat16)
        mm_state = state.astype(jnp.bfloat16)
        w_x_all = w_x_all.astype(jnp.bfloat16)
        w_h_ur = w_h_ur.astype(jnp.bfloat16)
        wph = wph.astype(jnp.bfloat16)

    weight_bytes = 4 * (w_x_all.size + w_h_ur.size + wph.size + ln_pack.size)
    vmem_limit, budget = _vmem_limits()
    tb = _pick_batch_tile(B, I_pad, H, weight_bytes, budget, batch_tile)
    grid = (B // tb,)

    def resident(arr):
        # Constant block index across the grid -> stays VMEM-resident; single
        # buffered since the block never changes (halves its VMEM footprint).
        return pl.BlockSpec(arr.shape, lambda i: (0, 0),
                            pipeline_mode=pl.Buffered(1))

    # Advisory cost for XLA's scheduler (tiny, latency-bound kernel).
    flops = 6 * B * H * (I_pad + H) + 30 * B * H
    transcendentals = 6 * B * H                     # 3 tanh + 3 rsqrt per element
    bytes_accessed = 4 * (B * I_pad + 2 * B * H) + weight_bytes
    cost = pl.CostEstimate(flops=flops, transcendentals=transcendentals,
                           bytes_accessed=bytes_accessed)

    return pl.pallas_call(
        gru_ln_kernel,
        out_shape=jax.ShapeDtypeStruct((B, H), state.dtype),
        grid_spec=pltpu.PrefetchScalarGridSpec(
            num_scalar_prefetch=0,
            grid=grid,
            in_specs=[
                pl.BlockSpec((tb, I_pad), lambda i: (i, 0)),   # x, tiled over batch
                pl.BlockSpec((tb, H), lambda i: (i, 0)),       # h, tiled over batch
                resident(w_x_all),
                resident(w_h_ur),
                resident(wph),
                resident(ln_pack),
            ],
            out_specs=pl.BlockSpec((tb, H), lambda i: (i, 0)),
        ),
        compiler_params=pltpu.CompilerParams(
            dimension_semantics=("parallel",),
            vmem_limit_bytes=vmem_limit),
        cost_estimate=cost,
    )(inputs, mm_state, w_x_all, w_h_ur, wph, ln_pack)


def init_params(key, input_size, hidden_size):
    """nn.Linear(bias=False) default init (+- 1/sqrt(fan_in)); LayerNorm affine
    params slightly perturbed from (1, 0) so the affine path is exercised."""
    I, H = input_size, hidden_size
    fan_in = I + H
    bound = 1.0 / (fan_in ** 0.5)
    params = {}
    for name, kk in zip(("update", "reset", "proposal"), jax.random.split(key, 3)):
        kw, kg, kb = jax.random.split(kk, 3)
        params[f"w_{name}"] = jax.random.uniform(
            kw, (fan_in, H), jnp.float32, minval=-bound, maxval=bound)
        params[f"g_{name}"] = (1.0 + 0.1 * jax.random.normal(kg, (1, H))).astype(jnp.float32)
        params[f"b_{name}"] = (0.1 * jax.random.normal(kb, (1, H))).astype(jnp.float32)
    return params


def gru_cell_layer_norm_ref(inputs, state, params, reset_bias=1.0):
    """Pure-JAX reference mirroring the PyTorch forward."""
    def ln(z, g, b):
        m = jnp.mean(z, axis=-1, keepdims=True)
        v = jnp.mean((z - m) ** 2, axis=-1, keepdims=True)
        return (z - m) / jnp.sqrt(v + LN_EPS) * g + b

    xh = jnp.concatenate([inputs, state], axis=-1)
    upd = jax.nn.sigmoid(ln(xh @ params["w_update"],
                            params["g_update"], params["b_update"]))
    rst = jax.nn.sigmoid(ln(xh @ params["w_reset"],
                            params["g_reset"], params["b_reset"]) + reset_bias)
    xrh = jnp.concatenate([inputs, rst * state], axis=-1)
    h_n = jnp.tanh(ln(xrh @ params["w_proposal"],
                      params["g_proposal"], params["b_proposal"]))
    return (1.0 - upd) * h_n + upd * state


if __name__ == "__main__":
    key = jax.random.PRNGKey(0)
    B, I, H = 8, 64, 128          # hidden=128 -> lane-dense output tile
    kx, ks, kp = jax.random.split(key, 3)
    x = jax.random.normal(kx, (B, I), dtype=jnp.float32)
    h0 = jax.random.normal(ks, (B, H), dtype=jnp.float32)
    params = init_params(kp, I, H)

    out = gru_cell_layer_norm(x, h0, params, reset_bias=1.0)
    out = jax.block_until_ready(out)

    ref = gru_cell_layer_norm_ref(x, h0, params, reset_bias=1.0)
    assert out.shape == (B, H), out.shape
    max_err = float(jnp.max(jnp.abs(out - ref)))
    assert jnp.allclose(out, ref, atol=1e-4, rtol=1e-4), f"max abs err = {max_err}"
    print("KERNEL_OK")
</pallas_src>

<mosaic_0001>
module attributes {stable_mosaic.version = 11 : i64} {
  func.func @gru_ln_kernel(%arg0: i32, %arg1: memref<8x128xf32, #tpu.memory_space<vmem>>, %arg2: memref<8x128xf32, #tpu.memory_space<vmem>>, %arg3: memref<128x384xf32, #tpu.memory_space<vmem>>, %arg4: memref<128x256xf32, #tpu.memory_space<vmem>>, %arg5: memref<128x128xf32, #tpu.memory_space<vmem>>, %arg6: memref<8x128xf32, #tpu.memory_space<vmem>>, %arg7: memref<8x128xf32, #tpu.memory_space<vmem>>) attributes {dimension_semantics = [#tpu.dimension_semantics<parallel>], iteration_bounds = array<i64: 1>, scalar_prefetch = 0 : i64, scratch_operands = 0 : i64, tpu.core_type = #tpu.core_type<tc>, window_params = [{transform_indices = @transform_0, window_bounds = array<i64: 8, 128>}, {transform_indices = @transform_1, window_bounds = array<i64: 8, 128>}, {pipeline_mode = #tpu.pipeline_mode<synchronous>, transform_indices = @transform_2, window_bounds = array<i64: 128, 384>}, {pipeline_mode = #tpu.pipeline_mode<synchronous>, transform_indices = @transform_3, window_bounds = array<i64: 128, 256>}, {pipeline_mode = #tpu.pipeline_mode<synchronous>, transform_indices = @transform_4, window_bounds = array<i64: 128, 128>}, {pipeline_mode = #tpu.pipeline_mode<synchronous>, transform_indices = @transform_5, window_bounds = array<i64: 8, 128>}, {transform_indices = @transform_6, window_bounds = array<i64: 8, 128>}]} {
    %c0 = arith.constant 0 : index
    %c0_0 = arith.constant 0 : index
    %0 = vector.load %arg2[%c0, %c0_0] : memref<8x128xf32, #tpu.memory_space<vmem>>, vector<8x128xf32>
    %c0_1 = arith.constant 0 : index
    %c0_2 = arith.constant 0 : index
    %1 = vector.load %arg6[%c0_1, %c0_2] : memref<8x128xf32, #tpu.memory_space<vmem>>, vector<8x128xf32>
    %2 = vector.extract_strided_slice %1 {offsets = [0, 0], sizes = [1, 128], strides = [1, 1]} : vector<8x128xf32> to vector<1x128xf32>
    %3 = vector.extract_strided_slice %1 {offsets = [1, 0], sizes = [1, 128], strides = [1, 1]} : vector<8x128xf32> to vector<1x128xf32>
    %4 = vector.extract_strided_slice %1 {offsets = [2, 0], sizes = [1, 128], strides = [1, 1]} : vector<8x128xf32> to vector<1x128xf32>
    %5 = vector.extract_strided_slice %1 {offsets = [3, 0], sizes = [1, 128], strides = [1, 1]} : vector<8x128xf32> to vector<1x128xf32>
    %6 = vector.extract_strided_slice %1 {offsets = [4, 0], sizes = [1, 128], strides = [1, 1]} : vector<8x128xf32> to vector<1x128xf32>
    %7 = vector.extract_strided_slice %1 {offsets = [5, 0], sizes = [1, 128], strides = [1, 1]} : vector<8x128xf32> to vector<1x128xf32>
    %c0_3 = arith.constant 0 : index
    %c0_4 = arith.constant 0 : index
    %8 = vector.load %arg1[%c0_3, %c0_4] : memref<8x128xf32, #tpu.memory_space<vmem>>, vector<8x128xf32>
    %c0_5 = arith.constant 0 : index
    %c0_6 = arith.constant 0 : index
    %9 = vector.load %arg3[%c0_5, %c0_6] : memref<128x384xf32, #tpu.memory_space<vmem>>, vector<128x384xf32>
    %cst = arith.constant dense<0.000000e+00> : vector<8x384xf32>
    %10 = tpu.matmul %8, %9, %cst {dimension_numbers = #tpu.dot_dimension_numbers<[1], [0], [0], [1], [0, 0, 1, 1], [], []>} : vector<8x128xf32>, vector<128x384xf32>, vector<8x384xf32> -> vector<8x384xf32>
    %c0_7 = arith.constant 0 : index
    %c0_8 = arith.constant 0 : index
    %11 = vector.load %arg2[%c0_7, %c0_8] : memref<8x128xf32, #tpu.memory_space<vmem>>, vector<8x128xf32>
    %c0_9 = arith.constant 0 : index
    %c0_10 = arith.constant 0 : index
    %12 = vector.load %arg4[%c0_9, %c0_10] : memref<128x256xf32, #tpu.memory_space<vmem>>, vector<128x256xf32>
    %cst_11 = arith.constant dense<0.000000e+00> : vector<8x256xf32>
    %13 = tpu.matmul %11, %12, %cst_11 {dimension_numbers = #tpu.dot_dimension_numbers<[1], [0], [0], [1], [0, 0, 1, 1], [], []>} : vector<8x128xf32>, vector<128x256xf32>, vector<8x256xf32> -> vector<8x256xf32>
    %14 = vector.extract_strided_slice %10 {offsets = [0, 0], sizes = [8, 128], strides = [1, 1]} : vector<8x384xf32> to vector<8x128xf32>
    %15 = vector.extract_strided_slice %13 {offsets = [0, 0], sizes = [8, 128], strides = [1, 1]} : vector<8x256xf32> to vector<8x128xf32>
    %16 = arith.addf %14, %15 : vector<8x128xf32>
    %cst_12 = arith.constant dense<0.000000e+00> : vector<8xf32>
    %17 = vector.multi_reduction <add>, %16, %cst_12 [1] : vector<8x128xf32> to vector<8xf32>
    %18 = vector.shape_cast %17 : vector<8xf32> to vector<8x1xf32>
    %cst_13 = arith.constant 1.280000e+02 : f32
    %19 = vector.broadcast %cst_13 : f32 to vector<8x1xf32>
    %20 = arith.divf %18, %19 : vector<8x1xf32>
    %21 = vector.broadcast %20 : vector<8x1xf32> to vector<8x128xf32>
    %22 = arith.subf %16, %21 : vector<8x128xf32>
    %23 = arith.mulf %22, %22 : vector<8x128xf32>
    %cst_14 = arith.constant dense<0.000000e+00> : vector<8xf32>
    %24 = vector.multi_reduction <add>, %23, %cst_14 [1] : vector<8x128xf32> to vector<8xf32>
    %25 = vector.shape_cast %24 : vector<8xf32> to vector<8x1xf32>
    %cst_15 = arith.constant 1.280000e+02 : f32
    %26 = vector.broadcast %cst_15 : f32 to vector<8x1xf32>
    %27 = arith.divf %25, %26 : vector<8x1xf32>
    %cst_16 = arith.constant 9.99999974E-6 : f32
    %28 = vector.broadcast %cst_16 : f32 to vector<8x1xf32>
    %29 = arith.addf %27, %28 : vector<8x1xf32>
    %30 = math.rsqrt %29 : vector<8x1xf32>
    %31 = vector.broadcast %30 : vector<8x1xf32> to vector<8x128xf32>
    %32 = arith.mulf %22, %31 : vector<8x128xf32>
    %33 = vector.broadcast %2 : vector<1x128xf32> to vector<8x128xf32>
    %34 = arith.mulf %32, %33 : vector<8x128xf32>
    %35 = vector.broadcast %3 : vector<1x128xf32> to vector<8x128xf32>
    %36 = arith.addf %34, %35 : vector<8x128xf32>
    %cst_17 = arith.constant 5.000000e-01 : f32
    %37 = vector.broadcast %cst_17 : f32 to vector<8x128xf32>
    %38 = arith.mulf %37, %36 : vector<8x128xf32>
    %39 = math.tanh %38 : vector<8x128xf32>
    %cst_18 = arith.constant 5.000000e-01 : f32
    %40 = vector.broadcast %cst_18 : f32 to vector<8x128xf32>
    %41 = arith.mulf %40, %39 : vector<8x128xf32>
    %cst_19 = arith.constant 5.000000e-01 : f32
    %42 = vector.broadcast %cst_19 : f32 to vector<8x128xf32>
    %43 = arith.addf %41, %42 : vector<8x128xf32>
    %44 = vector.extract_strided_slice %10 {offsets = [0, 128], sizes = [8, 128], strides = [1, 1]} : vector<8x384xf32> to vector<8x128xf32>
    %45 = vector.extract_strided_slice %13 {offsets = [0, 128], sizes = [8, 128], strides = [1, 1]} : vector<8x256xf32> to vector<8x128xf32>
    %46 = arith.addf %44, %45 : vector<8x128xf32>
    %cst_20 = arith.constant dense<0.000000e+00> : vector<8xf32>
    %47 = vector.multi_reduction <add>, %46, %cst_20 [1] : vector<8x128xf32> to vector<8xf32>
    %48 = vector.shape_cast %47 : vector<8xf32> to vector<8x1xf32>
    %cst_21 = arith.constant 1.280000e+02 : f32
    %49 = vector.broadcast %cst_21 : f32 to vector<8x1xf32>
    %50 = arith.divf %48, %49 : vector<8x1xf32>
    %51 = vector.broadcast %50 : vector<8x1xf32> to vector<8x128xf32>
    %52 = arith.subf %46, %51 : vector<8x128xf32>
    %53 = arith.mulf %52, %52 : vector<8x128xf32>
    %cst_22 = arith.constant dense<0.000000e+00> : vector<8xf32>
    %54 = vector.multi_reduction <add>, %53, %cst_22 [1] : vector<8x128xf32> to vector<8xf32>
    %55 = vector.shape_cast %54 : vector<8xf32> to vector<8x1xf32>
    %cst_23 = arith.constant 1.280000e+02 : f32
    %56 = vector.broadcast %cst_23 : f32 to vector<8x1xf32>
    %57 = arith.divf %55, %56 : vector<8x1xf32>
    %cst_24 = arith.constant 9.99999974E-6 : f32
    %58 = vector.broadcast %cst_24 : f32 to vector<8x1xf32>
    %59 = arith.addf %57, %58 : vector<8x1xf32>
    %60 = math.rsqrt %59 : vector<8x1xf32>
    %61 = vector.broadcast %60 : vector<8x1xf32> to vector<8x128xf32>
    %62 = arith.mulf %52, %61 : vector<8x128xf32>
    %63 = vector.broadcast %4 : vector<1x128xf32> to vector<8x128xf32>
    %64 = arith.mulf %62, %63 : vector<8x128xf32>
    %65 = vector.broadcast %5 : vector<1x128xf32> to vector<8x128xf32>
    %66 = arith.addf %64, %65 : vector<8x128xf32>
    %cst_25 = arith.constant 5.000000e-01 : f32
    %67 = vector.broadcast %cst_25 : f32 to vector<8x128xf32>
    %68 = arith.mulf %67, %66 : vector<8x128xf32>
    %69 = math.tanh %68 : vector<8x128xf32>
    %cst_26 = arith.constant 5.000000e-01 : f32
    %70 = vector.broadcast %cst_26 : f32 to vector<8x128xf32>
    %71 = arith.mulf %70, %69 : vector<8x128xf32>
    %cst_27 = arith.constant 5.000000e-01 : f32
    %72 = vector.broadcast %cst_27 : f32 to vector<8x128xf32>
    %73 = arith.addf %71, %72 : vector<8x128xf32>
    %74 = vector.extract_strided_slice %10 {offsets = [0, 256], sizes = [8, 128], strides = [1, 1]} : vector<8x384xf32> to vector<8x128xf32>
    %75 = arith.mulf %73, %0 : vector<8x128xf32>
    %c0_28 = arith.constant 0 : index
    %c0_29 = arith.constant 0 : index
    %76 = vector.load %arg5[%c0_28, %c0_29] : memref<128x128xf32, #tpu.memory_space<vmem>>, vector<128x128xf32>
    %cst_30 = arith.constant dense<0.000000e+00> : vector<8x128xf32>
    %77 = tpu.matmul %75, %76, %cst_30 {dimension_numbers = #tpu.dot_dimension_numbers<[1], [0], [0], [1], [0, 0, 1, 1], [], []>} : vector<8x128xf32>, vector<128x128xf32>, vector<8x128xf32> -> vector<8x128xf32>
    %78 = arith.addf %74, %77 : vector<8x128xf32>
    %cst_31 = arith.constant dense<0.000000e+00> : vector<8xf32>
    %79 = vector.multi_reduction <add>, %78, %cst_31 [1] : vector<8x128xf32> to vector<8xf32>
    %80 = vector.shape_cast %79 : vector<8xf32> to vector<8x1xf32>
    %cst_32 = arith.constant 1.280000e+02 : f32
    %81 = vector.broadcast %cst_32 : f32 to vector<8x1xf32>
    %82 = arith.divf %80, %81 : vector<8x1xf32>
    %83 = vector.broadcast %82 : vector<8x1xf32> to vector<8x128xf32>
    %84 = arith.subf %78, %83 : vector<8x128xf32>
    %85 = arith.mulf %84, %84 : vector<8x128xf32>
    %cst_33 = arith.constant dense<0.000000e+00> : vector<8xf32>
    %86 = vector.multi_reduction <add>, %85, %cst_33 [1] : vector<8x128xf32> to vector<8xf32>
    %87 = vector.shape_cast %86 : vector<8xf32> to vector<8x1xf32>
    %cst_34 = arith.constant 1.280000e+02 : f32
    %88 = vector.broadcast %cst_34 : f32 to vector<8x1xf32>
    %89 = arith.divf %87, %88 : vector<8x1xf32>
    %cst_35 = arith.constant 9.99999974E-6 : f32
    %90 = vector.broadcast %cst_35 : f32 to vector<8x1xf32>
    %91 = arith.addf %89, %90 : vector<8x1xf32>
    %92 = math.rsqrt %91 : vector<8x1xf32>
    %93 = vector.broadcast %92 : vector<8x1xf32> to vector<8x128xf32>
    %94 = arith.mulf %84, %93 : vector<8x128xf32>
    %95 = vector.broadcast %6 : vector<1x128xf32> to vector<8x128xf32>
    %96 = arith.mulf %94, %95 : vector<8x128xf32>
    %97 = vector.broadcast %7 : vector<1x128xf32> to vector<8x128xf32>
    %98 = arith.addf %96, %97 : vector<8x128xf32>
    %99 = math.tanh %98 : vector<8x128xf32>
    %cst_36 = arith.constant 1.000000e+00 : f32
    %100 = vector.broadcast %cst_36 : f32 to vector<8x128xf32>
    %101 = arith.subf %100, %43 : vector<8x128xf32>
    %102 = arith.mulf %101, %99 : vector<8x128xf32>
    %103 = arith.mulf %43, %0 : vector<8x128xf32>
    %104 = arith.addf %102, %103 : vector<8x128xf32>
    %c0_37 = arith.constant 0 : index
    %c0_38 = arith.constant 0 : index
    %105 = vector.load %arg7[%c0_37, %c0_38] : memref<8x128xf32, #tpu.memory_space<vmem>>, vector<8x128xf32>
    tpu.vector_store %arg7[%c0_37, %c0_38], %104 {strides = array<i32>} : memref<8x128xf32, #tpu.memory_space<vmem>>, vector<8x128xf32>,
    return
  }
  func.func @transform_0(%arg0: i32) -> (i32, i32) {
    %c0_i32 = arith.constant 0 : i32
    %c0_i32_0 = arith.constant 0 : i32
    return %arg0, %c0_i32 : i32, i32
  }
  func.func @transform_1(%arg0: i32) -> (i32, i32) {
    %c0_i32 = arith.constant 0 : i32
    %c0_i32_0 = arith.constant 0 : i32
    return %arg0, %c0_i32 : i32, i32
  }
  func.func @transform_2(%arg0: i32) -> (i32, i32) {
    %c0_i32 = arith.constant 0 : i32
    %c0_i32_0 = arith.constant 0 : i32
    %c0_i32_1 = arith.constant 0 : i32
    return %c0_i32, %c0_i32_0 : i32, i32
  }
  func.func @transform_3(%arg0: i32) -> (i32, i32) {
    %c0_i32 = arith.constant 0 : i32
    %c0_i32_0 = arith.constant 0 : i32
    %c0_i32_1 = arith.constant 0 : i32
    return %c0_i32, %c0_i32_0 : i32, i32
  }
  func.func @transform_4(%arg0: i32) -> (i32, i32) {
    %c0_i32 = arith.constant 0 : i32
    %c0_i32_0 = arith.constant 0 : i32
    %c0_i32_1 = arith.constant 0 : i32
    return %c0_i32, %c0_i32_0 : i32, i32
  }
  func.func @transform_5(%arg0: i32) -> (i32, i32) {
    %c0_i32 = arith.constant 0 : i32
    %c0_i32_0 = arith.constant 0 : i32
    %c0_i32_1 = arith.constant 0 : i32
    return %c0_i32, %c0_i32_0 : i32, i32
  }
  func.func @transform_6(%arg0: i32) -> (i32, i32) {
    %c0_i32 = arith.constant 0 : i32
    %c0_i32_0 = arith.constant 0 : i32
    return %arg0, %c0_i32 : i32, i32
  }
}

</mosaic_0001>

<llo_original>
// kernel: tpu_custom_call.1
$region0: #{tpu_custom_call.1}
  #allocation0 [shape = 'u32[]', space=smem, size = 0x4, offset = 0x4, fixed_abs, tag = 'smem constant byte address 0x4 - core index']
  #allocation1 [shape = 'u32[144,128]{1,0:T(1,128)}', space=vmem, size = 0x12000, scoped, tag = 'internal scratch']
  %s0 = inlined_call_operand.hbm [shape: f32[8,128], index: 0, kind: input, shape index: {}]
  %s1 = inlined_call_operand.hbm [shape: f32[8,128], index: 1, kind: input, shape index: {}]
  %s2 = inlined_call_operand.hbm [shape: f32[128,384], index: 2, kind: input, shape index: {}]
  %s3 = inlined_call_operand.hbm [shape: f32[128,256], index: 3, kind: input, shape index: {}]
  %s4 = inlined_call_operand.hbm [shape: f32[128,128], index: 4, kind: input, shape index: {}]
  %s5 = inlined_call_operand.vmem [shape: f32[8,128], index: 5, kind: input, shape index: {}]
  %s6 = inlined_call_operand.hbm [shape: f32[8,128], index: 6, kind: output, shape index: {}]
  %s7 = sld [smem:[#allocation0]]
  $region54: #{tpu_custom_call.1} parent=0
    _
  %s9 = ssub.s32 1, %s7
  %s10 = scalar_select 0, %s9, %s7
  $region1: #{tpu_custom_call.1} parent=0
    #allocation2 [shape = 'u8[4096]{0}', space=vmem, size = 0x1000, scoped, tag = 'input window, operand 0, single buffered']
    #allocation3 [shape = 's32[1]{0}', space=sflag, size = 0x4, scoped, tag = 'scoped memory for tpu_custom_call.1']
    #allocation4 [shape = 's32[1]{0}', space=sflag, size = 0x4, scoped, tag = 'scoped memory for tpu_custom_call.1']
    #allocation5 [shape = 'u8[4096]{0}', space=vmem, size = 0x1000, scoped, tag = 'input window, operand 1, single buffered']
    #allocation6 [shape = 's32[1]{0}', space=sflag, size = 0x4, scoped, tag = 'scoped memory for tpu_custom_call.1']
    #allocation7 [shape = 'u8[196608]{0}', space=vmem, size = 0x30000, scoped, tag = 'input window, operand 2, single buffered']
    #allocation8 [shape = 'u8[131072]{0}', space=vmem, size = 0x20000, scoped, tag = 'input window, operand 3, single buffered']
    #allocation9 [shape = 's32[1]{0}', space=sflag, size = 0x4, scoped, tag = 'scoped memory for tpu_custom_call.1']
    #allocation10 [shape = 'u8[65536]{0}', space=vmem, size = 0x10000, scoped, tag = 'input window, operand 4, single buffered']
    #allocation11 [shape = 'u8[4096]{0}', space=vmem, size = 0x1000, scoped, tag = 'output window, operand 0, single buffered']
    %11 = vsyncpa [#allocation3], 0
    %12 = vsyncpa [#allocation6], 0
    %13 = vsyncpa [#allocation9], 0
    %14 = vsyncpa [#allocation4], 0
    // Predicated region
    $region2: #{tpu_custom_call.1} parent=1 // pred_check
      _
    $region3: #{tpu_custom_call.1} parent=1 // pred_check_branch
      %16 = sbr.rel (0) target = $region5
    $region4: #{tpu_custom_call.1} parent=1 // pred_region
      %s18 = ssub.s32 128, 128
      %19 = vsyncadd [#allocation3], %s18
      %s21 = sshll.u32 [#allocation2], 4
      %s22 = int_to_ptr.vmem [resolvable:$true] %s21
      %24 = dma.hbm_to_vmem [thread:$0]  %s0, 128, %s22, [#allocation3]
    $region5: #{tpu_custom_call.1} parent=1 // pred_fallthru
      _
    // Predicated region
    $region6: #{tpu_custom_call.1} parent=1 // pred_check
      _
    $region7: #{tpu_custom_call.1} parent=1 // pred_check_branch
      %26 = sbr.rel (0) target = $region9
    $region8: #{tpu_custom_call.1} parent=1 // pred_region
      %s28 = ssub.s32 128, 128
      %29 = vsyncadd [#allocation6], %s28
      %s31 = sshll.u32 [#allocation5], 4
      %s32 = int_to_ptr.vmem [resolvable:$true] %s31
      %34 = dma.hbm_to_vmem [thread:$0]  %s1, 128, %s32, [#allocation6]
    $region9: #{tpu_custom_call.1} parent=1 // pred_fallthru
      _
    // Predicated region
    $region10: #{tpu_custom_call.1} parent=1 // pred_check
      _
    $region11: #{tpu_custom_call.1} parent=1 // pred_check_branch
      %36 = sbr.rel (0) target = $region13
    $region12: #{tpu_custom_call.1} parent=1 // pred_region
      %s38 = ssub.s32 6144, 6144
      %39 = vsyncadd [#allocation6], %s38
      %s40 = sshll.u32 [#allocation7], 4
      %s41 = int_to_ptr.vmem [resolvable:$true] %s40
      %46 = dma.hbm_to_vmem [thread:$0]  %s2, 6144, %s41, [#allocation6], 384, 384, 24
    $region13: #{tpu_custom_call.1} parent=1 // pred_fallthru
      _
    // Predicated region
    $region14: #{tpu_custom_call.1} parent=1 // pred_check
      _
    $region15: #{tpu_custom_call.1} parent=1 // pred_check_branch
      %48 = sbr.rel (0) target = $region17
    $region16: #{tpu_custom_call.1} parent=1 // pred_region
      %s50 = ssub.s32 4096, 4096
      %51 = vsyncadd [#allocation9], %s50
      %s52 = sshll.u32 [#allocation8], 4
      %s53 = int_to_ptr.vmem [resolvable:$true] %s52
      %58 = dma.hbm_to_vmem [thread:$0]  %s3, 4096, %s53, [#allocation9], 256, 256, 16
    $region17: #{tpu_custom_call.1} parent=1 // pred_fallthru
      _
    // Predicated region
    $region18: #{tpu_custom_call.1} parent=1 // pred_check
      _
    $region19: #{tpu_custom_call.1} parent=1 // pred_check_branch
      %60 = sbr.rel (0) target = $region21
    $region20: #{tpu_custom_call.1} parent=1 // pred_region
      %s62 = ssub.s32 2048, 2048
      %63 = vsyncadd [#allocation9], %s62
      %s64 = sshll.u32 [#allocation10], 4
      %s65 = int_to_ptr.vmem [resolvable:$true] %s64
      %70 = dma.hbm_to_vmem [thread:$0]  %s4, 2048, %s65, [#allocation9], 128, 128, 8
    $region21: #{tpu_custom_call.1} parent=1 // pred_fallthru
      _
    // Predicated region
    $region22: #{tpu_custom_call.1} parent=1 // pred_check
      _
    $region23: #{tpu_custom_call.1} parent=1 // pred_check_branch
      %72 = sbr.rel (0) target = $region25
    $region24: #{tpu_custom_call.1} parent=1 // pred_region
      _
    $region25: #{tpu_custom_call.1} parent=1 // pred_fallthru
      _
    // Predicated region
    $region26: #{tpu_custom_call.1} parent=1 // pred_check
      _
    $region27: #{tpu_custom_call.1} parent=1 // pred_check_branch
      %74 = sbr.rel (0) target = $region29
    $region28: #{tpu_custom_call.1} parent=1 // pred_region
      %75 = dma.done [#allocation3], 128
    $region29: #{tpu_custom_call.1} parent=1 // pred_fallthru
      _
    // Predicated region
    $region30: #{tpu_custom_call.1} parent=1 // pred_check
      _
    $region31: #{tpu_custom_call.1} parent=1 // pred_check_branch
      %77 = sbr.rel (0) target = $region33
    $region32: #{tpu_custom_call.1} parent=1 // pred_region
      %78 = dma.done [#allocation6], 128
    $region33: #{tpu_custom_call.1} parent=1 // pred_fallthru
      _
    // Predicated region
    $region34: #{tpu_custom_call.1} parent=1 // pred_check
      _
    $region35: #{tpu_custom_call.1} parent=1 // pred_check_branch
      %80 = sbr.rel (0) target = $region37
    $region36: #{tpu_custom_call.1} parent=1 // pred_region
      %81 = dma.done [#allocation6], 6144
    $region37: #{tpu_custom_call.1} parent=1 // pred_fallthru
      _
    // Predicated region
    $region38: #{tpu_custom_call.1} parent=1 // pred_check
      _
    $region39: #{tpu_custom_call.1} parent=1 // pred_check_branch
      %83 = sbr.rel (0) target = $region41
    $region40: #{tpu_custom_call.1} parent=1 // pred_region
      %84 = dma.done [#allocation9], 4096
    $region41: #{tpu_custom_call.1} parent=1 // pred_fallthru
      _
    // Predicated region
    $region42: #{tpu_custom_call.1} parent=1 // pred_check
      _
    $region43: #{tpu_custom_call.1} parent=1 // pred_check_branch
      %86 = sbr.rel (0) target = $region45
    $region44: #{tpu_custom_call.1} parent=1 // pred_region
      %87 = dma.done [#allocation9], 2048
    $region45: #{tpu_custom_call.1} parent=1 // pred_fallthru
      _
    %v88 = vld [vmem:[#allocation5] sm:$0xff]
    %v89 = vld [vmem:[%s5] sm:$0xff]
    %v90 = vld [vmem:[#allocation2] sm:$0xff]
    %v91 = vld [vmem:[#allocation7] sm:$0xff]
    %v92 = vld [vmem:[#allocation7 + $0x8] sm:$0xff]
    %v93 = vld [vmem:[#allocation7 + $0x10] sm:$0xff]
    %v94 = vld [vmem:[#allocation7 + $0x18] sm:$0xff]
    %v95 = vld [vmem:[#allocation7 + $0x20] sm:$0xff]
    %v96 = vld [vmem:[#allocation7 + $0x28] sm:$0xff]
    %v97 = vld [vmem:[#allocation7 + $0x30] sm:$0xff]
    %v98 = vld [vmem:[#allocation7 + $0x38] sm:$0xff]
    %v99 = vld [vmem:[#allocation7 + $0x40] sm:$0xff]
    %v100 = vld [vmem:[#allocation7 + $0x48] sm:$0xff]
    %v101 = vld [vmem:[#allocation7 + $0x50] sm:$0xff]
    %v102 = vld [vmem:[#allocation7 + $0x58] sm:$0xff]
    %v103 = vld [vmem:[#allocation7 + $0x60] sm:$0xff]
    %v104 = vld [vmem:[#allocation7 + $0x68] sm:$0xff]
    %v105 = vld [vmem:[#allocation7 + $0x70] sm:$0xff]
    %v106 = vld [vmem:[#allocation7 + $0x78] sm:$0xff]
    %v107 = vld [vmem:[#allocation7 + $0x80] sm:$0xff]
    %v108 = vld [vmem:[#allocation7 + $0x88] sm:$0xff]
    %v109 = vld [vmem:[#allocation7 + $0x90] sm:$0xff]
    %v110 = vld [vmem:[#allocation7 + $0x98] sm:$0xff]
    %v111 = vld [vmem:[#allocation7 + $0xa0] sm:$0xff]
    %v112 = vld [vmem:[#allocation7 + $0xa8] sm:$0xff]
    %v113 = vld [vmem:[#allocation7 + $0xb0] sm:$0xff]
    %v114 = vld [vmem:[#allocation7 + $0xb8] sm:$0xff]
    %v115 = vld [vmem:[#allocation7 + $0xc0] sm:$0xff]
    %v116 = vld [vmem:[#allocation7 + $0xc8] sm:$0xff]
    %v117 = vld [vmem:[#allocation7 + $0xd0] sm:$0xff]
    %v118 = vld [vmem:[#allocation7 + $0xd8] sm:$0xff]
    %v119 = vld [vmem:[#allocation7 + $0xe0] sm:$0xff]
    %v120 = vld [vmem:[#allocation7 + $0xe8] sm:$0xff]
    %v121 = vld [vmem:[#allocation7 + $0xf0] sm:$0xff]
    %v122 = vld [vmem:[#allocation7 + $0xf8] sm:$0xff]
    %v123 = vld [vmem:[#allocation7 + $0x100] sm:$0xff]
    %v124 = vld [vmem:[#allocation7 + $0x108] sm:$0xff]
    %v125 = vld [vmem:[#allocation7 + $0x110] sm:$0xff]
    %v126 = vld [vmem:[#allocation7 + $0x118] sm:$0xff]
    %v127 = vld [vmem:[#allocation7 + $0x120] sm:$0xff]
    %v128 = vld [vmem:[#allocation7 + $0x128] sm:$0xff]
    %v129 = vld [vmem:[#allocation7 + $0x130] sm:$0xff]
    %v130 = vld [vmem:[#allocation7 + $0x138] sm:$0xff]
    %v131 = vld [vmem:[#allocation7 + $0x140] sm:$0xff]
    %v132 = vld [vmem:[#allocation7 + $0x148] sm:$0xff]
    %v133 = vld [vmem:[#allocation7 + $0x150] sm:$0xff]
    %v134 = vld [vmem:[#allocation7 + $0x158] sm:$0xff]
    %v135 = vld [vmem:[#allocation7 + $0x160] sm:$0xff]
    %v136 = vld [vmem:[#allocation7 + $0x168] sm:$0xff]
    %v137 = vld [vmem:[#allocation7 + $0x170] sm:$0xff]
    %v138 = vld [vmem:[#allocation7 + $0x178] sm:$0xff]
    %139 = vmatprep.subr.mxu0 %v137
    %140 = vmatpush1.msra.mxu0 %v136
    %141 = vmatprep.subr.mxu0 %v134
    %142 = vmatpush1.msra.mxu0 %v133
    %143 = vmatprep.subr.mxu0 %v131
    %144 = vmatpush1.msra.mxu0 %v130
    %145 = vmatprep.subr.mxu0 %v128
    %146 = vmatpush1.msra.mxu0 %v127
    %147 = vmatprep.subr.mxu0 %v125
    %148 = vmatpush1.msra.mxu0 %v124
    %149 = vmatprep.subr.mxu0 %v122
    %150 = vmatpush1.msra.mxu0 %v121
    %151 = vmatprep.subr.mxu0 %v119
    %152 = vmatpush1.msra.mxu0 %v118
    %153 = vmatprep.subr.mxu0 %v116
    %154 = vmatpush1.msra.mxu0 %v115
    %155 = vmatprep.subr.mxu0 %v113
    %156 = vmatpush1.msra.mxu0 %v112
    %157 = vmatprep.subr.mxu0 %v110
    %158 = vmatpush1.msra.mxu0 %v109
    %159 = vmatprep.subr.mxu0 %v107
    %160 = vmatpush1.msra.mxu0 %v106
    %161 = vmatprep.subr.mxu0 %v104
    %162 = vmatpush1.msra.mxu0 %v103
    %163 = vmatprep.subr.mxu0 %v101
    %164 = vmatpush1.msra.mxu0 %v100
    %165 = vmatprep.subr.mxu0 %v98
    %166 = vmatpush1.msra.mxu0 %v97
    %167 = vmatprep.subr.mxu0 %v95
    %168 = vmatpush1.msra.mxu0 %v94
    %169 = vmatprep.subr.mxu0 %v92
    %170 = vmatpush1.msra.mxu0 %v91
    %171 = vmatprep.subr.mxu0 0.0
    %172 = vmatpush2.msra.mxu0 0.0
    %173 = vmatprep.subr.mxu0 0.0
    %174 = vmatpush2.msra.mxu0 0.0
    %175 = vmatprep.subr.mxu0 0.0
    %176 = vmatpush2.msra.mxu0 0.0
    %177 = vmatprep.subr.mxu0 0.0
    %178 = vmatpush2.msra.mxu0 0.0
    %179 = vmatprep.subr.mxu0 0.0
    %180 = vmatpush2.msra.mxu0 0.0
    %181 = vmatprep.subr.mxu0 0.0
    %182 = vmatpush2.msra.mxu0 0.0
    %183 = vmatprep.subr.mxu0 0.0
    %184 = vmatpush2.msra.mxu0 0.0
    %185 = vmatprep.subr.mxu0 0.0
    %186 = vmatpush2.msra.mxu0 0.0
    %187 = vmatprep.subr.mxu0 0.0
    %188 = vmatpush2.msra.mxu0 0.0
    %189 = vmatprep.subr.mxu0 0.0
    %190 = vmatpush2.msra.mxu0 0.0
    %191 = vmatprep.subr.mxu0 0.0
    %192 = vmatpush2.msra.mxu0 0.0
    %193 = vmatprep.subr.mxu0 0.0
    %194 = vmatpush2.msra.mxu0 0.0
    %195 = vmatprep.subr.mxu0 0.0
    %196 = vmatpush2.msra.mxu0 0.0
    %197 = vmatprep.subr.mxu0 0.0
    %198 = vmatpush2.msra.mxu0 0.0
    %199 = vmatprep.subr.mxu0 0.0
    %200 = vmatpush2.msra.mxu0 0.0
    %201 = vmatprep.subr.mxu0 0.0
    %202 = vmatpush2.msra.mxu0 0.0
    %203 = vmatprep.mubr.f32.mxu0 0.0
    %204 = vmatmul.mubr.f32.gmra.mxu0 %v90
    %v205 = vpop.f32.mrf.mxu0
    %v206 = vadd.f32 0.0, %v205
    %v207 = vpop.f32.mrf.mxu0
    %v208 = vadd.f32 0.0, %v207
    %209 = vdwg.mxu0
    %210 = vmatprep.subr.mxu0 0.0
    %211 = vmatpush1.msra.mxu0 %v138
    %212 = vmatprep.subr.mxu0 0.0
    %213 = vmatpush1.msra.mxu0 %v135
    %214 = vmatprep.subr.mxu0 0.0
    %215 = vmatpush1.msra.mxu0 %v132
    %216 = vmatprep.subr.mxu0 0.0
    %217 = vmatpush1.msra.mxu0 %v129
    %218 = vmatprep.subr.mxu0 0.0
    %219 = vmatpush1.msra.mxu0 %v126
    %220 = vmatprep.subr.mxu0 0.0
    %221 = vmatpush1.msra.mxu0 %v123
    %222 = vmatprep.subr.mxu0 0.0
    %223 = vmatpush1.msra.mxu0 %v120
    %224 = vmatprep.subr.mxu0 0.0
    %225 = vmatpush1.msra.mxu0 %v117
    %226 = vmatprep.subr.mxu0 0.0
    %227 = vmatpush1.msra.mxu0 %v114
    %228 = vmatprep.subr.mxu0 0.0
    %229 = vmatpush1.msra.mxu0 %v111
    %230 = vmatprep.subr.mxu0 0.0
    %231 = vmatpush1.msra.mxu0 %v108
    %232 = vmatprep.subr.mxu0 0.0
    %233 = vmatpush1.msra.mxu0 %v105
    %234 = vmatprep.subr.mxu0 0.0
    %235 = vmatpush1.msra.mxu0 %v102
    %236 = vmatprep.subr.mxu0 0.0
    %237 = vmatpush1.msra.mxu0 %v99
    %238 = vmatprep.subr.mxu0 0.0
    %239 = vmatpush1.msra.mxu0 %v96
    %240 = vmatprep.subr.mxu0 0.0
    %241 = vmatpush1.msra.mxu0 %v93
    %242 = vmatprep.subr.mxu0 0.0
    %243 = vmatpush2.msra.mxu0 0.0
    %244 = vmatprep.subr.mxu0 0.0
    %245 = vmatpush2.msra.mxu0 0.0
    %246 = vmatprep.subr.mxu0 0.0
    %247 = vmatpush2.msra.mxu0 0.0
    %248 = vmatprep.subr.mxu0 0.0
    %249 = vmatpush2.msra.mxu0 0.0
    %250 = vmatprep.subr.mxu0 0.0
    %251 = vmatpush2.msra.mxu0 0.0
    %252 = vmatprep.subr.mxu0 0.0
    %253 = vmatpush2.msra.mxu0 0.0
    %254 = vmatprep.subr.mxu0 0.0
    %255 = vmatpush2.msra.mxu0 0.0
    %256 = vmatprep.subr.mxu0 0.0
    %257 = vmatpush2.msra.mxu0 0.0
    %258 = vmatprep.subr.mxu0 0.0
    %259 = vmatpush2.msra.mxu0 0.0
    %260 = vmatprep.subr.mxu0 0.0
    %261 = vmatpush2.msra.mxu0 0.0
    %262 = vmatprep.subr.mxu0 0.0
    %263 = vmatpush2.msra.mxu0 0.0
    %264 = vmatprep.subr.mxu0 0.0
    %265 = vmatpush2.msra.mxu0 0.0
    %266 = vmatprep.subr.mxu0 0.0
    %267 = vmatpush2.msra.mxu0 0.0
    %268 = vmatprep.subr.mxu0 0.0
    %269 = vmatpush2.msra.mxu0 0.0
    %270 = vmatprep.subr.mxu0 0.0
    %271 = vmatpush2.msra.mxu0 0.0
    %272 = vmatprep.subr.mxu0 0.0
    %273 = vmatpush2.msra.mxu0 0.0
    %274 = vmatprep.mubr.f32.mxu0 0.0
    %275 = vmatmul.mubr.f32.gmra.mxu0 %v90
    %v276 = vpop.f32.mrf.mxu0
    %v277 = vadd.f32 0.0, %v276
    %v278 = vpop.f32.mrf.mxu0
    %279 = vdwg.mxu0
    %v280 = vld [vmem:[#allocation8] sm:$0xff]
    %v281 = vld [vmem:[#allocation8 + $0x8] sm:$0xff]
    %v282 = vld [vmem:[#allocation8 + $0x10] sm:$0xff]
    %v283 = vld [vmem:[#allocation8 + $0x18] sm:$0xff]
    %v284 = vld [vmem:[#allocation8 + $0x20] sm:$0xff]
    %v285 = vld [vmem:[#allocation8 + $0x28] sm:$0xff]
    %v286 = vld [vmem:[#allocation8 + $0x30] sm:$0xff]
    %v287 = vld [vmem:[#allocation8 + $0x38] sm:$0xff]
    %v288 = vld [vmem:[#allocation8 + $0x40] sm:$0xff]
    %v289 = vld [vmem:[#allocation8 + $0x48] sm:$0xff]
    %v290 = vld [vmem:[#allocation8 + $0x50] sm:$0xff]
    %v291 = vld [vmem:[#allocation8 + $0x58] sm:$0xff]
    %v292 = vld [vmem:[#allocation8 + $0x60] sm:$0xff]
    %v293 = vld [vmem:[#allocation8 + $0x68] sm:$0xff]
    %v294 = vld [vmem:[#allocation8 + $0x70] sm:$0xff]
    %v295 = vld [vmem:[#allocation8 + $0x78] sm:$0xff]
    %v296 = vld [vmem:[#allocation8 + $0x80] sm:$0xff]
    %v297 = vld [vmem:[#allocation8 + $0x88] sm:$0xff]
    %v298 = vld [vmem:[#allocation8 + $0x90] sm:$0xff]
    %v299 = vld [vmem:[#allocation8 + $0x98] sm:$0xff]
    %v300 = vld [vmem:[#allocation8 + $0xa0] sm:$0xff]
    %v301 = vld [vmem:[#allocation8 + $0xa8] sm:$0xff]
    %v302 = vld [vmem:[#allocation8 + $0xb0] sm:$0xff]
    %v303 = vld [vmem:[#allocation8 + $0xb8] sm:$0xff]
    %v304 = vld [vmem:[#allocation8 + $0xc0] sm:$0xff]
    %v305 = vld [vmem:[#allocation8 + $0xc8] sm:$0xff]
    %v306 = vld [vmem:[#allocation8 + $0xd0] sm:$0xff]
    %v307 = vld [vmem:[#allocation8 + $0xd8] sm:$0xff]
    %v308 = vld [vmem:[#allocation8 + $0xe0] sm:$0xff]
    %v309 = vld [vmem:[#allocation8 + $0xe8] sm:$0xff]
    %v310 = vld [vmem:[#allocation8 + $0xf0] sm:$0xff]
    %v311 = vld [vmem:[#allocation8 + $0xf8] sm:$0xff]
    %312 = vmatprep.subr.mxu0 %v311
    %313 = vmatpush1.msra.mxu0 %v310
    %314 = vmatprep.subr.mxu0 %v309
    %315 = vmatpush1.msra.mxu0 %v308
    %316 = vmatprep.subr.mxu0 %v307
    %317 = vmatpush1.msra.mxu0 %v306
    %318 = vmatprep.subr.mxu0 %v305
    %319 = vmatpush1.msra.mxu0 %v304
    %320 = vmatprep.subr.mxu0 %v303
    %321 = vmatpush1.msra.mxu0 %v302
    %322 = vmatprep.subr.mxu0 %v301
    %323 = vmatpush1.msra.mxu0 %v300
    %324 = vmatprep.subr.mxu0 %v299
    %325 = vmatpush1.msra.mxu0 %v298
    %326 = vmatprep.subr.mxu0 %v297
    %327 = vmatpush1.msra.mxu0 %v296
    %328 = vmatprep.subr.mxu0 %v295
    %329 = vmatpush1.msra.mxu0 %v294
    %330 = vmatprep.subr.mxu0 %v293
    %331 = vmatpush1.msra.mxu0 %v292
    %332 = vmatprep.subr.mxu0 %v291
    %333 = vmatpush1.msra.mxu0 %v290
    %334 = vmatprep.subr.mxu0 %v289
    %335 = vmatpush1.msra.mxu0 %v288
    %336 = vmatprep.subr.mxu0 %v287
    %337 = vmatpush1.msra.mxu0 %v286
    %338 = vmatprep.subr.mxu0 %v285
    %339 = vmatpush1.msra.mxu0 %v284
    %340 = vmatprep.subr.mxu0 %v283
    %341 = vmatpush1.msra.mxu0 %v282
    %342 = vmatprep.subr.mxu0 %v281
    %343 = vmatpush1.msra.mxu0 %v280
    %344 = vmatprep.subr.mxu0 0.0
    %345 = vmatpush2.msra.mxu0 0.0
    %346 = vmatprep.subr.mxu0 0.0
    %347 = vmatpush2.msra.mxu0 0.0
    %348 = vmatprep.subr.mxu0 0.0
    %349 = vmatpush2.msra.mxu0 0.0
    %350 = vmatprep.subr.mxu0 0.0
    %351 = vmatpush2.msra.mxu0 0.0
    %352 = vmatprep.subr.mxu0 0.0
    %353 = vmatpush2.msra.mxu0 0.0
    %354 = vmatprep.subr.mxu0 0.0
    %355 = vmatpush2.msra.mxu0 0.0
    %356 = vmatprep.subr.mxu0 0.0
    %357 = vmatpush2.msra.mxu0 0.0
    %358 = vmatprep.subr.mxu0 0.0
    %359 = vmatpush2.msra.mxu0 0.0
    %360 = vmatprep.subr.mxu0 0.0
    %361 = vmatpush2.msra.mxu0 0.0
    %362 = vmatprep.subr.mxu0 0.0
    %363 = vmatpush2.msra.mxu0 0.0
    %364 = vmatprep.subr.mxu0 0.0
    %365 = vmatpush2.msra.mxu0 0.0
    %366 = vmatprep.subr.mxu0 0.0
    %367 = vmatpush2.msra.mxu0 0.0
    %368 = vmatprep.subr.mxu0 0.0
    %369 = vmatpush2.msra.mxu0 0.0
    %370 = vmatprep.subr.mxu0 0.0
    %371 = vmatpush2.msra.mxu0 0.0
    %372 = vmatprep.subr.mxu0 0.0
    %373 = vmatpush2.msra.mxu0 0.0
    %374 = vmatprep.subr.mxu0 0.0
    %375 = vmatpush2.msra.mxu0 0.0
    %376 = vmatprep.mubr.f32.mxu0 0.0
    %377 = vmatmul.mubr.f32.gmra.mxu0 %v88
    %v378 = vpop.f32.mrf.mxu0
    %v379 = vadd.f32 0.0, %v378
    %v380 = vpop.f32.mrf.mxu0
    %v381 = vadd.f32 0.0, %v380
    %382 = vdwg.mxu0
    %v383 = vadd.f32 %v206, %v379
    %384 = vadd.xlane.f32.xlu0 %v383
    %v385 = vpop.xlane.xlu0 %384
    %v386 = vrcp.pop 128.0
    %v387 = vmul.f32 %v385, %v386
    %v388 = vsub.f32 %v383, %v387
    %v389 = vmul.f32 %v388, %v388
    %390 = vadd.xlane.f32.xlu0 %v389
    %v391 = vpop.xlane.xlu0 %390
    %v392 = vmul.f32 %v391, %v386
    %v393 = vadd.f32 %v392, 1e-05
    %v394 = vrsqrt.pop %v393
    %v395 = vmul.f32 %v388, %v394
    %v396 = vlaneseq
    %v397 = vshrl.u32 %v396, 7
    %v398 = vsub.s32 0, %v397
    %v399 = vrot.slane %v89, %v398
    %v400 = vmul.f32 %v395, %v399
    %v401 = vlaneseq
    %v402 = vshrl.u32 %v401, 7
    %v403 = vsub.s32 1, %v402
    %v404 = vrot.slane %v89, %v403
    %v405 = vadd.f32 %v400, %v404
    %v406 = vmul.f32 %v405, 0.5
    %v407 = vtanh.pop %v406
    %v408 = vmul.f32 %v407, 0.5
    %v409 = vadd.f32 %v408, 0.5
    %v410 = vadd.f32 %v208, %v381
    %411 = vadd.xlane.f32.xlu0 %v410
    %v412 = vpop.xlane.xlu0 %411
    %v413 = vmul.f32 %v412, %v386
    %v414 = vsub.f32 %v410, %v413
    %v415 = vmul.f32 %v414, %v414
    %416 = vadd.xlane.f32.xlu0 %v415
    %v417 = vpop.xlane.xlu0 %416
    %v418 = vmul.f32 %v417, %v386
    %v419 = vadd.f32 %v418, 1e-05
    %v420 = vrsqrt.pop %v419
    %v421 = vmul.f32 %v414, %v420
    %v422 = vlaneseq
    %v423 = vshrl.u32 %v422, 7
    %v424 = vsub.s32 2, %v423
    %v425 = vrot.slane %v89, %v424
    %v426 = vmul.f32 %v421, %v425
    %v427 = vlaneseq
    %v428 = vshrl.u32 %v427, 7
    %v429 = vsub.s32 3, %v428
    %v430 = vrot.slane %v89, %v429
    %v431 = vadd.f32 %v426, %v430
    %v432 = vmul.f32 %v431, 0.5
    %v433 = vtanh.pop %v432
    %v434 = vmul.f32 %v433, 0.5
    %v435 = vadd.f32 %v434, 0.5
    %v436 = vmul.f32 %v435, %v88
    %v437 = vld [vmem:[#allocation10] sm:$0xff]
    %v438 = vld [vmem:[#allocation10 + $0x8] sm:$0xff]
    %v439 = vld [vmem:[#allocation10 + $0x10] sm:$0xff]
    %v440 = vld [vmem:[#allocation10 + $0x18] sm:$0xff]
    %v441 = vld [vmem:[#allocation10 + $0x20] sm:$0xff]
    %v442 = vld [vmem:[#allocation10 + $0x28] sm:$0xff]
    %v443 = vld [vmem:[#allocation10 + $0x30] sm:$0xff]
    %v444 = vld [vmem:[#allocation10 + $0x38] sm:$0xff]
    %v445 = vld [vmem:[#allocation10 + $0x40] sm:$0xff]
    %v446 = vld [vmem:[#allocation10 + $0x48] sm:$0xff]
    %v447 = vld [vmem:[#allocation10 + $0x50] sm:$0xff]
    %v448 = vld [vmem:[#allocation10 + $0x58] sm:$0xff]
    %v449 = vld [vmem:[#allocation10 + $0x60] sm:$0xff]
    %v450 = vld [vmem:[#allocation10 + $0x68] sm:$0xff]
    %v451 = vld [vmem:[#allocation10 + $0x70] sm:$0xff]
    %v452 = vld [vmem:[#allocation10 + $0x78] sm:$0xff]
    %453 = vmatprep.subr.mxu0 0.0
    %454 = vmatpush1.msra.mxu0 %v452
    %455 = vmatprep.subr.mxu0 0.0
    %456 = vmatpush1.msra.mxu0 %v451
    %457 = vmatprep.subr.mxu0 0.0
    %458 = vmatpush1.msra.mxu0 %v450
    %459 = vmatprep.subr.mxu0 0.0
    %460 = vmatpush1.msra.mxu0 %v449
    %461 = vmatprep.subr.mxu0 0.0
    %462 = vmatpush1.msra.mxu0 %v448
    %463 = vmatprep.subr.mxu0 0.0
    %464 = vmatpush1.msra.mxu0 %v447
    %465 = vmatprep.subr.mxu0 0.0
    %466 = vmatpush1.msra.mxu0 %v446
    %467 = vmatprep.subr.mxu0 0.0
    %468 = vmatpush1.msra.mxu0 %v445
    %469 = vmatprep.subr.mxu0 0.0
    %470 = vmatpush1.msra.mxu0 %v444
    %471 = vmatprep.subr.mxu0 0.0
    %472 = vmatpush1.msra.mxu0 %v443
    %473 = vmatprep.subr.mxu0 0.0
    %474 = vmatpush1.msra.mxu0 %v442
    %475 = vmatprep.subr.mxu0 0.0
    %476 = vmatpush1.msra.mxu0 %v441
    %477 = vmatprep.subr.mxu0 0.0
    %478 = vmatpush1.msra.mxu0 %v440
    %479 = vmatprep.subr.mxu0 0.0
    %480 = vmatpush1.msra.mxu0 %v439
    %481 = vmatprep.subr.mxu0 0.0
    %482 = vmatpush1.msra.mxu0 %v438
    %483 = vmatprep.subr.mxu0 0.0
    %484 = vmatpush1.msra.mxu0 %v437
    %485 = vmatprep.subr.mxu0 0.0
    %486 = vmatpush2.msra.mxu0 0.0
    %487 = vmatprep.subr.mxu0 0.0
    %488 = vmatpush2.msra.mxu0 0.0
    %489 = vmatprep.subr.mxu0 0.0
    %490 = vmatpush2.msra.mxu0 0.0
    %491 = vmatprep.subr.mxu0 0.0
    %492 = vmatpush2.msra.mxu0 0.0
    %493 = vmatprep.subr.mxu0 0.0
    %494 = vmatpush2.msra.mxu0 0.0
    %495 = vmatprep.subr.mxu0 0.0
    %496 = vmatpush2.msra.mxu0 0.0
    %497 = vmatprep.subr.mxu0 0.0
    %498 = vmatpush2.msra.mxu0 0.0
    %499 = vmatprep.subr.mxu0 0.0
    %500 = vmatpush2.msra.mxu0 0.0
    %501 = vmatprep.subr.mxu0 0.0
    %502 = vmatpush2.msra.mxu0 0.0
    %503 = vmatprep.subr.mxu0 0.0
    %504 = vmatpush2.msra.mxu0 0.0
    %505 = vmatprep.subr.mxu0 0.0
    %506 = vmatpush2.msra.mxu0 0.0
    %507 = vmatprep.subr.mxu0 0.0
    %508 = vmatpush2.msra.mxu0 0.0
    %509 = vmatprep.subr.mxu0 0.0
    %510 = vmatpush2.msra.mxu0 0.0
    %511 = vmatprep.subr.mxu0 0.0
    %512 = vmatpush2.msra.mxu0 0.0
    %513 = vmatprep.subr.mxu0 0.0
    %514 = vmatpush2.msra.mxu0 0.0
    %515 = vmatprep.subr.mxu0 0.0
    %516 = vmatpush2.msra.mxu0 0.0
    %517 = vmatprep.mubr.f32.mxu0 0.0
    %518 = vmatmul.mubr.f32.gmra.mxu0 %v436
    %v519 = vpop.f32.mrf.mxu0
    %v520 = vadd.f32 0.0, %v519
    %v521 = vpop.f32.mrf.mxu0
    %522 = vdwg.mxu0
    %v523 = vadd.f32 %v277, %v520
    %524 = vadd.xlane.f32.xlu0 %v523
    %v525 = vpop.xlane.xlu0 %524
    %v526 = vmul.f32 %v525, %v386
    %v527 = vsub.f32 %v523, %v526
    %v528 = vmul.f32 %v527, %v527
    %529 = vadd.xlane.f32.xlu0 %v528
    %v530 = vpop.xlane.xlu0 %529
    %v531 = vmul.f32 %v530, %v386
    %v532 = vadd.f32 %v531, 1e-05
    %v533 = vrsqrt.pop %v532
    %v534 = vmul.f32 %v527, %v533
    %v535 = vlaneseq
    %v536 = vshrl.u32 %v535, 7
    %v537 = vsub.s32 4, %v536
    %v538 = vrot.slane %v89, %v537
    %v539 = vmul.f32 %v534, %v538
    %v540 = vlaneseq
    %v541 = vshrl.u32 %v540, 7
    %v542 = vsub.s32 5, %v541
    %v543 = vrot.slane %v89, %v542
    %v544 = vadd.f32 %v539, %v543
    %v545 = vtanh.pop %v544
    %v546 = vsub.f32 1.0, %v409
    %v547 = vmul.f32 %v546, %v545
    %v548 = vmul.f32 %v409, %v88
    %v549 = vadd.f32 %v547, %v548
    %550 = vst [vmem:[#allocation11] sm:$0xff] %v549
    // Predicated region
    $region46: #{tpu_custom_call.1} parent=1 // pred_check
      _
    $region47: #{tpu_custom_call.1} parent=1 // pred_check_branch
      %552 = sbr.rel (0) target = $region49
    $region48: #{tpu_custom_call.1} parent=1 // pred_region
      %s554 = ssub.s32 128, 128
      %555 = vsyncadd [#allocation4], %s554
      %s557 = sshll.u32 [#allocation11], 4
      %s558 = int_to_ptr.vmem [resolvable:$true] %s557
      %560 = dma.vmem_to_hbm [thread:$0]  %s558, 128, %s6, [#allocation4]
    $region49: #{tpu_custom_call.1} parent=1 // pred_fallthru
      _
    // Predicated region
    $region50: #{tpu_custom_call.1} parent=1 // pred_check
      _
    $region51: #{tpu_custom_call.1} parent=1 // pred_check_branch
      %562 = sbr.rel (0) target = $region53
    $region52: #{tpu_custom_call.1} parent=1 // pred_region
      %563 = dma.done [#allocation4], 128
    $region53: #{tpu_custom_call.1} parent=1 // pred_fallthru
      _
    %564 = vsyncpa [#allocation3], 1
    %565 = vsyncpa [#allocation6], 1
    %566 = vsyncpa [#allocation9], 1
    %567 = vsyncpa [#allocation4], 1

</llo_original>
